<compile_context>
chip_gen: v6e
topology: v6e:2x2x1
jax: 0.10.0
libtpu: 0.0.40
codegen_flags: <defaults>
</compile_context>

<pallas_src>
import jax
import jax.numpy as jnp
from jax.experimental import pallas as pl
from jax.experimental.pallas import tpu as pltpu

_LANE = 128


def assembly_kernel(src_ref, dest_ref, out_ref):
    # src_ref/dest_ref: (4, tile)  rows = [x, y, z, last-feature], lanes = nodes
    # out_ref:          (5, tile)  rows = [dx, dy, dz, norm, f]
    diff = dest_ref[...] - src_ref[...]           # (4, tile), one full-width VPU op

    dx = diff[0:1, :]
    dy = diff[1:2, :]
    dz = diff[2:3, :]

    # NOTE: torch computes grad_r = f_r3 / disp_r but never uses it (dead code);
    # intentionally not emitted here to avoid spurious div-by-zero.
    out_ref[0:3, :] = diff[0:3, :]                               # disp_r
    out_ref[3:4, :] = jnp.sqrt(dx * dx + dy * dy + dz * dz)      # norm_r (pure VPU + EUP)
    out_ref[4:5, :] = diff[3:4, :]                               # f_r


def assembly_forward(src, dest, edge_attr=None, u=None, batch=None, *, tile_nodes=65536):
    """Pallas equivalent of AssemblyModel.forward with net=None.

    src, dest: (N, F) node features; first 3 columns = position, last = scalar.
    Returns (N, 5) = concat(disp_r, norm_r, f_r).
    """
    del edge_attr, u, batch  # unused, mirrors the torch forward
    N, F = src.shape
    dtype = src.dtype

    # Stream only the used columns, feature-major: (4, N), nodes on the lane axis.
    src_fm = jnp.concatenate([src[:, :3], src[:, -1:]], axis=-1).T
    dest_fm = jnp.concatenate([dest[:, :3], dest[:, -1:]], axis=-1).T

    # Lane tile: multiple of 128, no bigger than the (128-rounded) problem size.
    n_up = ((N + _LANE - 1) // _LANE) * _LANE
    tile = max(_LANE, (min(tile_nodes, n_up) // _LANE) * _LANE)
    n_pad = ((N + tile - 1) // tile) * tile
    if n_pad != N:
        pad = n_pad - N
        src_fm = jnp.pad(src_fm, ((0, 0), (0, pad)))
        dest_fm = jnp.pad(dest_fm, ((0, 0), (0, pad)))

    grid = (n_pad // tile,)

    cost = pl.CostEstimate(
        flops=7 * n_pad,                       # 4 sub + 3 mul/add-ish per node
        transcendentals=n_pad,                 # one sqrt per node
        bytes_accessed=(2 * 4 + 5) * 4 * n_pad,  # 2 inputs x 4 rows + 5 output rows, fp32
    )

    out_fm = pl.pallas_call(
        assembly_kernel,
        out_shape=jax.ShapeDtypeStruct((5, n_pad), dtype),
        grid=grid,
        in_specs=[
            pl.BlockSpec((4, tile), lambda i: (0, i)),
            pl.BlockSpec((4, tile), lambda i: (0, i)),
        ],
        out_specs=pl.BlockSpec((5, tile), lambda i: (0, i)),
        compiler_params=pltpu.CompilerParams(
            dimension_semantics=("parallel",),
        ),
        cost_estimate=cost,
    )(src_fm, dest_fm)

    # Back to node-major (N, 5); padding lanes are dropped.
    return out_fm[:, :N].T


def assembly_ref(src, dest):
    """Pure-JAX reference of the torch forward (net=None)."""
    disp_r = dest[:, :3] - src[:, :3]
    f_r = (dest[:, -1] - src[:, -1]).reshape(-1, 1)
    norm_r = jnp.linalg.norm(disp_r, axis=-1).reshape(-1, 1)
    return jnp.concatenate([disp_r, norm_r, f_r], axis=-1)


if __name__ == "__main__":
    key = jax.random.PRNGKey(0)

    # Small case: N = 16 nodes, F = 4 features (3 position + 1 scalar field).
    k1, k2, k3, k4 = jax.random.split(key, 4)
    N, F = 16, 4
    src = jax.random.normal(k1, (N, F), dtype=jnp.float32)
    dest = jax.random.normal(k2, (N, F), dtype=jnp.float32)

    # edge_attr / u / batch are ignored by the forward pass; pass placeholders.
    edge_attr = jnp.zeros((N, 1), dtype=jnp.float32)
    u = jnp.zeros((1, 1), dtype=jnp.float32)
    batch = jnp.zeros((N,), dtype=jnp.int32)

    out = jax.block_until_ready(assembly_forward(src, dest, edge_attr, u, batch))
    ref = assembly_ref(src, dest)
    assert out.shape == (N, 5)
    assert jnp.allclose(out, ref, atol=1e-5, rtol=1e-5)

    # Second case: non-multiple-of-128 N and wider F to exercise padding +
    # column slicing, with a small tile so the grid has multiple steps.
    N2, F2 = 300, 6
    src2 = jax.random.normal(k3, (N2, F2), dtype=jnp.float32)
    dest2 = jax.random.normal(k4, (N2, F2), dtype=jnp.float32)
    out2 = jax.block_until_ready(assembly_forward(src2, dest2, tile_nodes=128))
    ref2 = assembly_ref(src2, dest2)
    assert out2.shape == (N2, 5)
    assert jnp.allclose(out2, ref2, atol=1e-5, rtol=1e-5)

    print("KERNEL_OK")
</pallas_src>

<mosaic_0001>
module attributes {stable_mosaic.version = 11 : i64} {
  func.func @assembly_kernel(%arg0: i32, %arg1: memref<4x128xf32, #tpu.memory_space<vmem>>, %arg2: memref<4x128xf32, #tpu.memory_space<vmem>>, %arg3: memref<5x128xf32, #tpu.memory_space<vmem>>) attributes {dimension_semantics = [#tpu.dimension_semantics<parallel>], iteration_bounds = array<i64: 1>, scalar_prefetch = 0 : i64, scratch_operands = 0 : i64, tpu.core_type = #tpu.core_type<tc>, window_params = [{transform_indices = @transform_0, window_bounds = array<i64: 4, 128>}, {transform_indices = @transform_1, window_bounds = array<i64: 4, 128>}, {transform_indices = @transform_2, window_bounds = array<i64: 5, 128>}]} {
    %c0 = arith.constant 0 : index
    %c0_0 = arith.constant 0 : index
    %0 = vector.load %arg2[%c0, %c0_0] : memref<4x128xf32, #tpu.memory_space<vmem>>, vector<4x128xf32>
    %c0_1 = arith.constant 0 : index
    %c0_2 = arith.constant 0 : index
    %1 = vector.load %arg1[%c0_1, %c0_2] : memref<4x128xf32, #tpu.memory_space<vmem>>, vector<4x128xf32>
    %2 = arith.subf %0, %1 : vector<4x128xf32>
    %3 = vector.extract_strided_slice %2 {offsets = [0, 0], sizes = [1, 128], strides = [1, 1]} : vector<4x128xf32> to vector<1x128xf32>
    %4 = vector.extract_strided_slice %2 {offsets = [1, 0], sizes = [1, 128], strides = [1, 1]} : vector<4x128xf32> to vector<1x128xf32>
    %5 = vector.extract_strided_slice %2 {offsets = [2, 0], sizes = [1, 128], strides = [1, 1]} : vector<4x128xf32> to vector<1x128xf32>
    %6 = vector.extract_strided_slice %2 {offsets = [0, 0], sizes = [3, 128], strides = [1, 1]} : vector<4x128xf32> to vector<3x128xf32>
    %c0_3 = arith.constant 0 : index
    %c0_4 = arith.constant 0 : index
    %7 = vector.load %arg3[%c0_3, %c0_4] : memref<5x128xf32, #tpu.memory_space<vmem>>, vector<3x128xf32>
    tpu.vector_store %arg3[%c0_3, %c0_4], %6 {strides = array<i32>} : memref<5x128xf32, #tpu.memory_space<vmem>>, vector<3x128xf32>,
    %8 = arith.mulf %3, %3 : vector<1x128xf32>
    %9 = arith.mulf %4, %4 : vector<1x128xf32>
    %10 = arith.addf %8, %9 : vector<1x128xf32>
    %11 = arith.mulf %5, %5 : vector<1x128xf32>
    %12 = arith.addf %10, %11 : vector<1x128xf32>
    %13 = math.sqrt %12 : vector<1x128xf32>
    %c3 = arith.constant 3 : index
    %c0_5 = arith.constant 0 : index
    %14 = vector.load %arg3[%c3, %c0_5] : memref<5x128xf32, #tpu.memory_space<vmem>>, vector<1x128xf32>
    tpu.vector_store %arg3[%c3, %c0_5], %13 {strides = array<i32>} : memref<5x128xf32, #tpu.memory_space<vmem>>, vector<1x128xf32>,
    %15 = vector.extract_strided_slice %2 {offsets = [3, 0], sizes = [1, 128], strides = [1, 1]} : vector<4x128xf32> to vector<1x128xf32>
    %c4 = arith.constant 4 : index
    %c0_6 = arith.constant 0 : index
    %16 = vector.load %arg3[%c4, %c0_6] : memref<5x128xf32, #tpu.memory_space<vmem>>, vector<1x128xf32>
    tpu.vector_store %arg3[%c4, %c0_6], %15 {strides = array<i32>} : memref<5x128xf32, #tpu.memory_space<vmem>>, vector<1x128xf32>,
    return
  }
  func.func @transform_0(%arg0: i32) -> (i32, i32) {
    %c0_i32 = arith.constant 0 : i32
    %c0_i32_0 = arith.constant 0 : i32
    return %c0_i32, %arg0 : i32, i32
  }
  func.func @transform_1(%arg0: i32) -> (i32, i32) {
    %c0_i32 = arith.constant 0 : i32
    %c0_i32_0 = arith.constant 0 : i32
    return %c0_i32, %arg0 : i32, i32
  }
  func.func @transform_2(%arg0: i32) -> (i32, i32) {
    %c0_i32 = arith.constant 0 : i32
    %c0_i32_0 = arith.constant 0 : i32
    return %c0_i32, %arg0 : i32, i32
  }
}

</mosaic_0001>

<llo_original>
// kernel: tpu_custom_call.1
$region0: #{tpu_custom_call.1}
  #allocation0 [shape = 'u32[]', space=smem, size = 0x4, offset = 0x4, fixed_abs, tag = 'smem constant byte address 0x4 - core index']
  #allocation1 [shape = 'u32[144,128]{1,0:T(1,128)}', space=vmem, size = 0x12000, scoped, tag = 'internal scratch']
  %s0 = inlined_call_operand.hbm [shape: f32[4,128], index: 0, kind: input, shape index: {}]
  %s1 = inlined_call_operand.hbm [shape: f32[4,128], index: 1, kind: input, shape index: {}]
  %s2 = inlined_call_operand.hbm [shape: f32[5,128], index: 2, kind: output, shape index: {}]
  %s3 = sld [smem:[#allocation0]]
  $region26: #{tpu_custom_call.1} parent=0
    _
  %s5 = ssub.s32 1, %s3
  %s6 = scalar_select 0, %s5, %s3
  $region1: #{tpu_custom_call.1} parent=0
    #allocation2 [shape = 'u8[2048]{0}', space=vmem, size = 0x800, scoped, tag = 'input window, operand 0, single buffered']
    #allocation3 [shape = 's32[1]{0}', space=sflag, size = 0x4, scoped, tag = 'scoped memory for tpu_custom_call.1']
    #allocation4 [shape = 's32[1]{0}', space=sflag, size = 0x4, scoped, tag = 'scoped memory for tpu_custom_call.1']
    #allocation5 [shape = 'u8[2048]{0}', space=vmem, size = 0x800, scoped, tag = 'input window, operand 1, single buffered']
    #allocation6 [shape = 's32[1]{0}', space=sflag, size = 0x4, scoped, tag = 'scoped memory for tpu_custom_call.1']
    #allocation7 [shape = 'u8[4096]{0}', space=vmem, size = 0x1000, scoped, tag = 'output window, operand 0, single buffered']
    %7 = vsyncpa [#allocation3], 0
    %8 = vsyncpa [#allocation6], 0
    %9 = vsyncpa [#allocation4], 0
    // Predicated region
    $region2: #{tpu_custom_call.1} parent=1 // pred_check
      _
    $region3: #{tpu_custom_call.1} parent=1 // pred_check_branch
      %11 = sbr.rel (0) target = $region5
    $region4: #{tpu_custom_call.1} parent=1 // pred_region
      %s13 = ssub.s32 64, 64
      %14 = vsyncadd [#allocation3], %s13
      %s16 = sshll.u32 [#allocation2], 4
      %s17 = int_to_ptr.vmem [resolvable:$true] %s16
      %19 = dma.hbm_to_vmem [thread:$0]  %s0, 64, %s17, [#allocation3]
    $region5: #{tpu_custom_call.1} parent=1 // pred_fallthru
      _
    // Predicated region
    $region6: #{tpu_custom_call.1} parent=1 // pred_check
      _
    $region7: #{tpu_custom_call.1} parent=1 // pred_check_branch
      %21 = sbr.rel (0) target = $region9
    $region8: #{tpu_custom_call.1} parent=1 // pred_region
      %s23 = ssub.s32 64, 64
      %24 = vsyncadd [#allocation6], %s23
      %s26 = sshll.u32 [#allocation5], 4
      %s27 = int_to_ptr.vmem [resolvable:$true] %s26
      %29 = dma.hbm_to_vmem [thread:$0]  %s1, 64, %s27, [#allocation6]
    $region9: #{tpu_custom_call.1} parent=1 // pred_fallthru
      _
    // Predicated region
    $region10: #{tpu_custom_call.1} parent=1 // pred_check
      _
    $region11: #{tpu_custom_call.1} parent=1 // pred_check_branch
      %31 = sbr.rel (0) target = $region13
    $region12: #{tpu_custom_call.1} parent=1 // pred_region
      %32 = dma.done [#allocation3], 64
    $region13: #{tpu_custom_call.1} parent=1 // pred_fallthru
      _
    // Predicated region
    $region14: #{tpu_custom_call.1} parent=1 // pred_check
      _
    $region15: #{tpu_custom_call.1} parent=1 // pred_check_branch
      %34 = sbr.rel (0) target = $region17
    $region16: #{tpu_custom_call.1} parent=1 // pred_region
      %35 = dma.done [#allocation6], 64
    $region17: #{tpu_custom_call.1} parent=1 // pred_fallthru
      _
    %v36 = vld [vmem:[#allocation5] sm:$0xf]
    %v37 = vld [vmem:[#allocation2] sm:$0xf]
    %v38 = vsub.f32 %v36, %v37
    %39 = vst [vmem:[#allocation7] sm:$0x7] %v38
    %v40 = vmul.f32 %v38, %v38
    %v42 = vrot.slane %v40, 1
    %v44 = vadd.f32 %v40, %v42
    %v45 = vrot.slane %v40, 2
    %v47 = vadd.f32 %v44, %v45
    %v48 = vrsqrt.pop %v47
    %v49 = vmul.f32 %v47, %v48
    %vm50 = vcmp.eq.f32.partialorder %v47, inf
    %v51 = vsel %vm50, %v47, %v49
    %vm52 = vcmp.eq.f32.partialorder %v47, 0.0
    %v53 = vand.u32 %v47, 2147483648
    %v54 = vsel %vm52, %v53, %v51
    %55 = vst [vmem:[#allocation7 + $0x3] sm:$0x1] %v54
    %56 = vst [vmem:[#allocation7 + $0x1] sm:$0x8] %v38
    // Predicated region
    $region18: #{tpu_custom_call.1} parent=1 // pred_check
      _
    $region19: #{tpu_custom_call.1} parent=1 // pred_check_branch
      %58 = sbr.rel (0) target = $region21
    $region20: #{tpu_custom_call.1} parent=1 // pred_region
      %s60 = ssub.s32 128, 128
      %61 = vsyncadd [#allocation4], %s60
      %s63 = sshll.u32 [#allocation7], 4
      %s64 = int_to_ptr.vmem [resolvable:$true] %s63
      %66 = dma.vmem_to_hbm [thread:$0]  %s64, 128, %s2, [#allocation4]
    $region21: #{tpu_custom_call.1} parent=1 // pred_fallthru
      _
    // Predicated region
    $region22: #{tpu_custom_call.1} parent=1 // pred_check
      _
    $region23: #{tpu_custom_call.1} parent=1 // pred_check_branch
      %68 = sbr.rel (0) target = $region25
    $region24: #{tpu_custom_call.1} parent=1 // pred_region
      %69 = dma.done [#allocation4], 128
    $region25: #{tpu_custom_call.1} parent=1 // pred_fallthru
      _
    %70 = vsyncpa [#allocation3], 1
    %71 = vsyncpa [#allocation6], 1
    %72 = vsyncpa [#allocation4], 1

</llo_original>
